<compile_context>
chip_gen: v6e
topology: v6e:2x2x1
jax: 0.10.0
libtpu: 0.0.40
codegen_flags: <defaults>
</compile_context>

<pallas_src>
import functools
import math

import jax
import jax.numpy as jnp
from jax import lax
from jax.experimental import pallas as pl
from jax.experimental.pallas import tpu as pltpu


# ----------------------------- Pallas kernel ------------------------------- #

def resnet_block_kernel(x_ref, w1_ref, b1_ref, w2_ref, bf_ref, o_ref, *, H, Bblk):
    """Fused ResNet block for a batch-block of images (lane-packed layout).

    x_ref  : (Bblk, H, W*Cin_p)        bf16  lane-packed input (h, w*Cin_p + ci)
    w1_ref : (W*Cin_p, 3*WC1 + WC2)    bf16  [band(kh=0)|band(kh=1)|band(kh=2)|1x1 shortcut]
    b1_ref : (1, WC1)                  f32   BN1 bias tiled per w position
    w2_ref : (WC1, 3*WC2)              bf16  [band(kh=0)|band(kh=1)|band(kh=2)]
    bf_ref : (1, WC2)                  f32   BN2 bias + shortcut BN bias, tiled
    o_ref  : (Bblk, H, WC2)            bf16  lane-packed output (h, w*C2 + c2)
    """
    WC1 = b1_ref.shape[-1]
    WC2 = bf_ref.shape[-1]
    M = Bblk * H

    x = x_ref[...].reshape(M, x_ref.shape[-1])          # (M, W*Cin_p) bf16

    def shifted_sum(a0, a1, a2, width):
        # out[r] = a0[r-1] + a1[r] + a2[r+1], with zero at per-image row edges.
        row = lax.broadcasted_iota(jnp.int32, (M, width), 0)
        rif = row % H if Bblk > 1 else row               # row index within image
        down = jnp.where(rif == 0, 0.0,
                         pltpu.roll(a0, shift=1, axis=0))        # r gets a0[r-1]
        up = jnp.where(rif == H - 1, 0.0,
                       pltpu.roll(a2, shift=M - 1, axis=0))      # r gets a2[r+1]
        return down + a1 + up

    # ---- layer 1 (conv3x3 + BN1) and the 1x1 shortcut in ONE wide matmul ----
    p = jnp.dot(x, w1_ref[...], preferred_element_type=jnp.float32)  # (M, 3*WC1+WC2)
    p0 = p[:, :WC1]
    p1 = p[:, WC1:2 * WC1]
    p2 = p[:, 2 * WC1:3 * WC1]
    sc = p[:, 3 * WC1:]                                   # shortcut conv+BN (no bias yet)

    h1 = jnp.maximum(shifted_sum(p0, p1, p2, WC1) + b1_ref[...], 0.0)
    h1 = h1.astype(jnp.bfloat16)                          # matches reference precision

    # ---- layer 2 (conv3x3 + BN2) as one wide matmul ----
    q = jnp.dot(h1, w2_ref[...], preferred_element_type=jnp.float32)  # (M, 3*WC2)
    q0 = q[:, :WC2]
    q1 = q[:, WC2:2 * WC2]
    q2 = q[:, 2 * WC2:]

    # ---- residual add + biases + final ReLU, lane-dense bf16 store ----
    out = jnp.maximum(shifted_sum(q0, q1, q2, WC2) + sc + bf_ref[...], 0.0)
    o_ref[...] = out.reshape(Bblk, H, WC2).astype(o_ref.dtype)


# ------------------------------- wrapper ------------------------------------ #

def _pick_bblk(N, H, m_target=128):
    """Batch images per grid step: raise matmul M toward m_target rows, but keep
    at least 2 grid blocks when N > 1 so both v7x TensorCores get work."""
    cap = max(1, m_target // max(H, 1))
    if N > 1:
        cap = min(cap, (N + 1) // 2)
    cap = max(1, min(cap, N))
    for b in range(cap, 0, -1):
        if N % b == 0:
            return b
    return 1


def resnet_block_forward(x_nchw, params, *, block_batch=None):
    """Pallas ResNetBlock forward. x_nchw: (N, Cin, H, W) -> (N, C2, H, W) bf16."""
    N, Cin, H, W = x_nchw.shape
    WC_in_p = params["w1f"].shape[0]
    Cin_p = WC_in_p // W
    WC1 = params["b1t"].shape[-1]
    WC2 = params["bft"].shape[-1]
    C2 = WC2 // W

    # NCHW -> NHWC, zero-pad channels to Cin_p, lane-pack to (N, H, W*Cin_p) bf16.
    x = jnp.transpose(x_nchw, (0, 2, 3, 1))
    if Cin_p != Cin:
        x = jnp.pad(x, ((0, 0), (0, 0), (0, 0), (0, Cin_p - Cin)))
    x = x.reshape(N, H, W * Cin_p).astype(jnp.bfloat16)

    Bblk = block_batch if block_batch is not None else _pick_bblk(N, H)
    grid = (N // Bblk,)

    kern = functools.partial(resnet_block_kernel, H=H, Bblk=Bblk)
    out = pl.pallas_call(
        kern,
        out_shape=jax.ShapeDtypeStruct((N, H, WC2), jnp.bfloat16),
        grid_spec=pltpu.PrefetchScalarGridSpec(
            num_scalar_prefetch=0,
            grid=grid,
            in_specs=[
                pl.BlockSpec((Bblk, H, WC_in_p), lambda n: (n, 0, 0)),
                pl.BlockSpec(params["w1f"].shape, lambda n: (0, 0)),
                pl.BlockSpec((1, WC1), lambda n: (0, 0)),
                pl.BlockSpec(params["w2f"].shape, lambda n: (0, 0)),
                pl.BlockSpec((1, WC2), lambda n: (0, 0)),
            ],
            out_specs=pl.BlockSpec((Bblk, H, WC2), lambda n: (n, 0, 0)),
        ),
        compiler_params=pltpu.CompilerParams(
            dimension_semantics=("parallel",)),
    )(x, params["w1f"], params["b1t"], params["w2f"], params["bft"])

    # (N, H, W*C2) lane-packed -> NCHW (bf16; cast downstream if f32 is needed).
    return jnp.transpose(out.reshape(N, H, W, C2), (0, 3, 1, 2))


# ------------------- host-side (one-time) parameter prep ------------------- #

def build_band_weights_3x3(w_hwio, W):
    """(3, 3, Cin, Cout) -> (3, W*Cin, W*Cout) block-banded matrices.

    out[kh, wp*Cin+ci, w*Cout+co] = w_hwio[kh, wp-w+1, ci, co] if |wp-w|<=1 else 0
    (horizontal taps + horizontal zero padding are encoded in the band structure).
    """
    KH, KW, Cin, Cout = w_hwio.shape
    out = jnp.zeros((KH, W * Cin, W * Cout), jnp.float32)
    for w in range(W):
        for kw in range(KW):
            wp = w + kw - 1
            if 0 <= wp < W:
                out = out.at[:, wp * Cin:(wp + 1) * Cin,
                             w * Cout:(w + 1) * Cout].set(w_hwio[:, kw])
    return out


def build_band_weight_1x1(ws_io, W):
    """(Cin, Cout) -> (W*Cin, W*Cout) block-diagonal matrix."""
    Cin, Cout = ws_io.shape
    out = jnp.zeros((W * Cin, W * Cout), jnp.float32)
    for w in range(W):
        out = out.at[w * Cin:(w + 1) * Cin, w * Cout:(w + 1) * Cout].set(ws_io)
    return out


def _padded_cin(Cin, W, lane=128):
    """Smallest Cin_p >= Cin making W*Cin_p a multiple of 128 (if cheap)."""
    step = lane // math.gcd(W, lane)
    cin_p = ((Cin + step - 1) // step) * step
    return cin_p if cin_p <= max(2 * Cin, 8) else Cin


def build_fused_params(w1f, b1, w2f, b2, wsf, bs, W):
    """Fold everything into two fused banded matmul weights + two bias rows."""
    Cin = w1f.shape[2]
    Cin_p = _padded_cin(Cin, W)
    if Cin_p != Cin:
        w1f = jnp.pad(w1f, ((0, 0), (0, 0), (0, Cin_p - Cin), (0, 0)))
        wsf = jnp.pad(wsf, ((0, 0), (0, 0), (0, Cin_p - Cin), (0, 0)))

    w1b = build_band_weights_3x3(w1f, W)            # (3, W*Cin_p, W*C1)
    w2b = build_band_weights_3x3(w2f, W)            # (3, W*C1, W*C2)
    wsb = build_band_weight_1x1(wsf[0, 0], W)       # (W*Cin_p, W*C2)

    w1_fused = jnp.concatenate([w1b[0], w1b[1], w1b[2], wsb], axis=-1)
    w2_fused = jnp.concatenate([w2b[0], w2b[1], w2b[2]], axis=-1)

    return {
        "w1f": w1_fused.astype(jnp.bfloat16),        # (W*Cin_p, 3*WC1 + WC2)
        "w2f": w2_fused.astype(jnp.bfloat16),        # (WC1, 3*WC2)
        "b1t": jnp.tile(b1, W)[None, :],             # (1, W*C1) f32
        "bft": jnp.tile(b2 + bs, W)[None, :],        # (1, W*C2) f32
    }


def bn_fold(gamma, beta, mean, var, eps=1e-5):
    scale = gamma / jnp.sqrt(var + eps)
    bias = beta - mean * scale
    return scale, bias


# --------------------------- pure-JAX reference ----------------------------- #

def ref_forward(x_nchw, w1f, b1, w2f, b2, wsf, bs):
    """lax.conv reference with matching mixed precision (bf16 operands, f32 acc)."""
    x = jnp.transpose(x_nchw, (0, 2, 3, 1))

    def conv(inp, w_hwio, pad):
        return lax.conv_general_dilated(
            inp, w_hwio, (1, 1), [(pad, pad), (pad, pad)],
            dimension_numbers=("NHWC", "HWIO", "NHWC"))

    h = jnp.maximum(conv(x, w1f, 1) + b1, 0.0)
    h = h.astype(jnp.bfloat16).astype(jnp.float32)   # kernel's layer-2 bf16 operand
    main = conv(h, w2f, 1) + b2
    sc = conv(x, wsf, 0) + bs
    out = jnp.maximum(main + sc, 0.0)
    return jnp.transpose(out, (0, 3, 1, 2))


# ------------------------------- main --------------------------------------- #

if __name__ == "__main__":
    # Module config: ResNetBlock(in_channels=4, channels=(8, 8), kernels=(3, 3), stride=1)
    N, Cin, H, W = 2, 4, 16, 16
    C1, C2 = 8, 8

    key = jax.random.PRNGKey(0)
    ks = jax.random.split(key, 8)

    def bf16_repr(a):  # round to bf16-representable f32 values
        return a.astype(jnp.bfloat16).astype(jnp.float32)

    # Conv weights in HWIO layout; bias=False in the module.
    w1_hwio = 0.2 * jax.random.normal(ks[0], (3, 3, Cin, C1), jnp.float32)
    w2_hwio = 0.2 * jax.random.normal(ks[1], (3, 3, C1, C2), jnp.float32)
    ws_hwio = 0.2 * jax.random.normal(ks[2], (1, 1, Cin, C2), jnp.float32)

    # BatchNorm parameters (eval mode, deterministic non-trivial values).
    def bn_params(k, c):
        k1, k2, k3, k4 = jax.random.split(k, 4)
        gamma = 1.0 + 0.1 * jax.random.normal(k1, (c,), jnp.float32)
        beta = 0.1 * jax.random.normal(k2, (c,), jnp.float32)
        mean = 0.1 * jax.random.normal(k3, (c,), jnp.float32)
        var = 1.0 + 0.5 * jax.nn.sigmoid(jax.random.normal(k4, (c,), jnp.float32))
        return bn_fold(gamma, beta, mean, var)

    s1, b1 = bn_params(ks[3], C1)
    s2, b2 = bn_params(ks[4], C2)
    ss, bs = bn_params(ks[5], C2)

    # Fold BN scale into the conv weights and round to bf16-representable values.
    w1f = bf16_repr(w1_hwio * s1)
    w2f = bf16_repr(w2_hwio * s2)
    wsf = bf16_repr(ws_hwio * ss)

    params = build_fused_params(w1f, b1, w2f, b2, wsf, bs, W)

    x = bf16_repr(jax.random.normal(ks[6], (N, Cin, H, W), jnp.float32))

    out = jax.jit(resnet_block_forward)(x, params)
    out = jax.block_until_ready(out)

    ref = jax.block_until_ready(ref_forward(x, w1f, b1, w2f, b2, wsf, bs))
    assert out.shape == (N, C2, H, W), out.shape
    out_f32 = out.astype(jnp.float32)
    if not jnp.allclose(out_f32, ref, rtol=2e-2, atol=2e-2):
        max_err = float(jnp.max(jnp.abs(out_f32 - ref)))
        raise AssertionError(f"Pallas output mismatch vs reference, max_err={max_err}")

    print("KERNEL_OK")
</pallas_src>

<mosaic_0001>
module attributes {stable_mosaic.version = 11 : i64} {
  func.func @resnet_block_kernel(%arg0: i32, %arg1: memref<1x16x128xbf16, #tpu.memory_space<vmem>>, %arg2: memref<128x512xbf16, #tpu.memory_space<vmem>>, %arg3: memref<1x128xf32, #tpu.memory_space<vmem>>, %arg4: memref<128x384xbf16, #tpu.memory_space<vmem>>, %arg5: memref<1x128xf32, #tpu.memory_space<vmem>>, %arg6: memref<1x16x128xbf16, #tpu.memory_space<vmem>>) attributes {dimension_semantics = [#tpu.dimension_semantics<parallel>], iteration_bounds = array<i64: 2>, scalar_prefetch = 0 : i64, scratch_operands = 0 : i64, tpu.core_type = #tpu.core_type<tc>, window_params = [{transform_indices = @transform_0, window_bounds = array<i64: 1, 16, 128>}, {pipeline_mode = #tpu.pipeline_mode<synchronous>, transform_indices = @transform_1, window_bounds = array<i64: 128, 512>}, {pipeline_mode = #tpu.pipeline_mode<synchronous>, transform_indices = @transform_2, window_bounds = array<i64: 1, 128>}, {pipeline_mode = #tpu.pipeline_mode<synchronous>, transform_indices = @transform_3, window_bounds = array<i64: 128, 384>}, {pipeline_mode = #tpu.pipeline_mode<synchronous>, transform_indices = @transform_4, window_bounds = array<i64: 1, 128>}, {transform_indices = @transform_5, window_bounds = array<i64: 1, 16, 128>}]} {
    %c0 = arith.constant 0 : index
    %c0_0 = arith.constant 0 : index
    %c0_1 = arith.constant 0 : index
    %0 = vector.load %arg1[%c0, %c0_0, %c0_1] : memref<1x16x128xbf16, #tpu.memory_space<vmem>>, vector<1x16x128xbf16>
    %1 = vector.shape_cast %0 : vector<1x16x128xbf16> to vector<16x128xbf16>
    %c0_2 = arith.constant 0 : index
    %c0_3 = arith.constant 0 : index
    %2 = vector.load %arg2[%c0_2, %c0_3] : memref<128x512xbf16, #tpu.memory_space<vmem>>, vector<128x512xbf16>
    %cst = arith.constant dense<0.000000e+00> : vector<16x512xf32>
    %3 = tpu.matmul %1, %2, %cst {dimension_numbers = #tpu.dot_dimension_numbers<[1], [0], [0], [1], [0, 0, 1, 1], [], []>} : vector<16x128xbf16>, vector<128x512xbf16>, vector<16x512xf32> -> vector<16x512xf32>
    %4 = vector.extract_strided_slice %3 {offsets = [0, 0], sizes = [16, 128], strides = [1, 1]} : vector<16x512xf32> to vector<16x128xf32>
    %5 = vector.extract_strided_slice %3 {offsets = [0, 128], sizes = [16, 128], strides = [1, 1]} : vector<16x512xf32> to vector<16x128xf32>
    %6 = vector.extract_strided_slice %3 {offsets = [0, 256], sizes = [16, 128], strides = [1, 1]} : vector<16x512xf32> to vector<16x128xf32>
    %7 = vector.extract_strided_slice %3 {offsets = [0, 384], sizes = [16, 128], strides = [1, 1]} : vector<16x512xf32> to vector<16x128xf32>
    %8 = tpu.iota {dimensions = array<i32: 0>} : vector<16x128xi32>
    %c0_i32 = arith.constant 0 : i32
    %9 = vector.broadcast %c0_i32 : i32 to vector<16x128xi32>
    %10 = arith.cmpi eq, %8, %9 : vector<16x128xi32>
    %c1_i32 = arith.constant 1 : i32
    %11 = tpu.dynamic_rotate %4 by %c1_i32 dim 0 : vector<16x128xf32>, i32 -> vector<16x128xf32>
    %cst_4 = arith.constant 0.000000e+00 : f32
    %12 = vector.broadcast %cst_4 : f32 to vector<16x128xf32>
    %13 = arith.select %10, %12, %11 : vector<16x128xi1>, vector<16x128xf32>
    %c15_i32 = arith.constant 15 : i32
    %14 = vector.broadcast %c15_i32 : i32 to vector<16x128xi32>
    %15 = arith.cmpi eq, %8, %14 : vector<16x128xi32>
    %c15_i32_5 = arith.constant 15 : i32
    %16 = tpu.dynamic_rotate %6 by %c15_i32_5 dim 0 : vector<16x128xf32>, i32 -> vector<16x128xf32>
    %cst_6 = arith.constant 0.000000e+00 : f32
    %17 = vector.broadcast %cst_6 : f32 to vector<16x128xf32>
    %18 = arith.select %15, %17, %16 : vector<16x128xi1>, vector<16x128xf32>
    %19 = arith.addf %13, %5 : vector<16x128xf32>
    %20 = arith.addf %19, %18 : vector<16x128xf32>
    %c0_7 = arith.constant 0 : index
    %c0_8 = arith.constant 0 : index
    %21 = vector.load %arg3[%c0_7, %c0_8] : memref<1x128xf32, #tpu.memory_space<vmem>>, vector<1x128xf32>
    %22 = vector.broadcast %21 : vector<1x128xf32> to vector<16x128xf32>
    %23 = arith.addf %20, %22 : vector<16x128xf32>
    %cst_9 = arith.constant 0.000000e+00 : f32
    %24 = vector.broadcast %cst_9 : f32 to vector<16x128xf32>
    %25 = arith.maximumf %23, %24 : vector<16x128xf32>
    %26 = arith.truncf %25 : vector<16x128xf32> to vector<16x128xbf16>
    %c0_10 = arith.constant 0 : index
    %c0_11 = arith.constant 0 : index
    %27 = vector.load %arg4[%c0_10, %c0_11] : memref<128x384xbf16, #tpu.memory_space<vmem>>, vector<128x384xbf16>
    %cst_12 = arith.constant dense<0.000000e+00> : vector<16x384xf32>
    %28 = tpu.matmul %26, %27, %cst_12 {dimension_numbers = #tpu.dot_dimension_numbers<[1], [0], [0], [1], [0, 0, 1, 1], [], []>} : vector<16x128xbf16>, vector<128x384xbf16>, vector<16x384xf32> -> vector<16x384xf32>
    %29 = vector.extract_strided_slice %28 {offsets = [0, 0], sizes = [16, 128], strides = [1, 1]} : vector<16x384xf32> to vector<16x128xf32>
    %30 = vector.extract_strided_slice %28 {offsets = [0, 128], sizes = [16, 128], strides = [1, 1]} : vector<16x384xf32> to vector<16x128xf32>
    %31 = vector.extract_strided_slice %28 {offsets = [0, 256], sizes = [16, 128], strides = [1, 1]} : vector<16x384xf32> to vector<16x128xf32>
    %32 = tpu.iota {dimensions = array<i32: 0>} : vector<16x128xi32>
    %c0_i32_13 = arith.constant 0 : i32
    %33 = vector.broadcast %c0_i32_13 : i32 to vector<16x128xi32>
    %34 = arith.cmpi eq, %32, %33 : vector<16x128xi32>
    %c1_i32_14 = arith.constant 1 : i32
    %35 = tpu.dynamic_rotate %29 by %c1_i32_14 dim 0 : vector<16x128xf32>, i32 -> vector<16x128xf32>
    %cst_15 = arith.constant 0.000000e+00 : f32
    %36 = vector.broadcast %cst_15 : f32 to vector<16x128xf32>
    %37 = arith.select %34, %36, %35 : vector<16x128xi1>, vector<16x128xf32>
    %c15_i32_16 = arith.constant 15 : i32
    %38 = vector.broadcast %c15_i32_16 : i32 to vector<16x128xi32>
    %39 = arith.cmpi eq, %32, %38 : vector<16x128xi32>
    %c15_i32_17 = arith.constant 15 : i32
    %40 = tpu.dynamic_rotate %31 by %c15_i32_17 dim 0 : vector<16x128xf32>, i32 -> vector<16x128xf32>
    %cst_18 = arith.constant 0.000000e+00 : f32
    %41 = vector.broadcast %cst_18 : f32 to vector<16x128xf32>
    %42 = arith.select %39, %41, %40 : vector<16x128xi1>, vector<16x128xf32>
    %43 = arith.addf %37, %30 : vector<16x128xf32>
    %44 = arith.addf %43, %42 : vector<16x128xf32>
    %45 = arith.addf %44, %7 : vector<16x128xf32>
    %c0_19 = arith.constant 0 : index
    %c0_20 = arith.constant 0 : index
    %46 = vector.load %arg5[%c0_19, %c0_20] : memref<1x128xf32, #tpu.memory_space<vmem>>, vector<1x128xf32>
    %47 = vector.broadcast %46 : vector<1x128xf32> to vector<16x128xf32>
    %48 = arith.addf %45, %47 : vector<16x128xf32>
    %cst_21 = arith.constant 0.000000e+00 : f32
    %49 = vector.broadcast %cst_21 : f32 to vector<16x128xf32>
    %50 = arith.maximumf %48, %49 : vector<16x128xf32>
    %51 = vector.shape_cast %50 : vector<16x128xf32> to vector<1x16x128xf32>
    %52 = arith.truncf %51 : vector<1x16x128xf32> to vector<1x16x128xbf16>
    %c0_22 = arith.constant 0 : index
    %c0_23 = arith.constant 0 : index
    %c0_24 = arith.constant 0 : index
    %53 = vector.load %arg6[%c0_22, %c0_23, %c0_24] : memref<1x16x128xbf16, #tpu.memory_space<vmem>>, vector<1x16x128xbf16>
    tpu.vector_store %arg6[%c0_22, %c0_23, %c0_24], %52 {strides = array<i32>} : memref<1x16x128xbf16, #tpu.memory_space<vmem>>, vector<1x16x128xbf16>,
    return
  }
  func.func @transform_0(%arg0: i32) -> (i32, i32, i32) {
    %c0_i32 = arith.constant 0 : i32
    %c0_i32_0 = arith.constant 0 : i32
    %c0_i32_1 = arith.constant 0 : i32
    return %arg0, %c0_i32, %c0_i32_0 : i32, i32, i32
  }
  func.func @transform_1(%arg0: i32) -> (i32, i32) {
    %c0_i32 = arith.constant 0 : i32
    %c0_i32_0 = arith.constant 0 : i32
    %c0_i32_1 = arith.constant 0 : i32
    return %c0_i32, %c0_i32_0 : i32, i32
  }
  func.func @transform_2(%arg0: i32) -> (i32, i32) {
    %c0_i32 = arith.constant 0 : i32
    %c0_i32_0 = arith.constant 0 : i32
    %c0_i32_1 = arith.constant 0 : i32
    return %c0_i32, %c0_i32_0 : i32, i32
  }
  func.func @transform_3(%arg0: i32) -> (i32, i32) {
    %c0_i32 = arith.constant 0 : i32
    %c0_i32_0 = arith.constant 0 : i32
    %c0_i32_1 = arith.constant 0 : i32
    return %c0_i32, %c0_i32_0 : i32, i32
  }
  func.func @transform_4(%arg0: i32) -> (i32, i32) {
    %c0_i32 = arith.constant 0 : i32
    %c0_i32_0 = arith.constant 0 : i32
    %c0_i32_1 = arith.constant 0 : i32
    return %c0_i32, %c0_i32_0 : i32, i32
  }
  func.func @transform_5(%arg0: i32) -> (i32, i32, i32) {
    %c0_i32 = arith.constant 0 : i32
    %c0_i32_0 = arith.constant 0 : i32
    %c0_i32_1 = arith.constant 0 : i32
    return %arg0, %c0_i32, %c0_i32_0 : i32, i32, i32
  }
}

</mosaic_0001>

<llo_original>
// kernel: resnet_block_forward.1
$region0: #{resnet_block_forward.1}
  #allocation0 [shape = 'u32[]', space=smem, size = 0x4, offset = 0x4, fixed_abs, tag = 'smem constant byte address 0x4 - core index']
  #allocation1 [shape = 'u32[144,128]{1,0:T(1,128)}', space=vmem, size = 0x12000, scoped, tag = 'internal scratch']
  %s0 = inlined_call_operand.vmem [shape: bf16[2,16,128], index: 0, kind: input, shape index: {}]
  %s1 = inlined_call_operand.vmem [shape: bf16[128,512], index: 1, kind: input, shape index: {}]
  %s2 = inlined_call_operand.vmem [shape: f32[1,128], index: 2, kind: input, shape index: {}]
  %s3 = inlined_call_operand.vmem [shape: bf16[128,384], index: 3, kind: input, shape index: {}]
  %s4 = inlined_call_operand.vmem [shape: f32[1,128], index: 4, kind: input, shape index: {}]
  %s5 = inlined_call_operand.vmem [shape: bf16[2,16,128], index: 5, kind: output, shape index: {}]
  %s6 = sld [smem:[#allocation0]]
  $region53: #{resnet_block_forward.1} parent=0
    _
  %s8 = ssub.s32 1, %s6
  %s9 = scalar_select 0, %s8, %s6
  loop: start=0, step=1, limit=4
  $region2: #{resnet_block_forward.1} parent=0 // loop_pre_header
    _
  $region3: #{resnet_block_forward.1} parent=0 // loop_header
    %s11 = sphi 0, %s15
    %p12 = scmp.ge.s32.totalorder %s11, 4
    %s21 = sphi 0, %s23
    %s24 = sphi 0, %s21
    %s25 = sphi 0, %s24
    %s41 = sphi 0, %s25
    %s45 = sphi 0, %s45
    %s47 = sphi 0, %s45
    %s48 = sphi 0, %s47
    %s62 = sphi 0, %s48
    %s66 = sphi 0, %s66
    %s68 = sphi 0, %s66
    %s69 = sphi 0, %s68
    %s83 = sphi 0, %s69
    %s87 = sphi 0, %s87
    %s89 = sphi 0, %s87
    %s90 = sphi 0, %s89
    %s104 = sphi 0, %s90
    %s108 = sphi 0, %s108
    %s110 = sphi 0, %s108
    %s111 = sphi 0, %s110
    %s125 = sphi 0, %s111
    %s131 = sphi 0, %s133
    %s134 = sphi 0, %s131
    %s135 = sphi 0, %s134
    %s151 = sphi 0, %s135
  $region4: #{resnet_block_forward.1} parent=0 // loop_header_branch
    %14 = sbr.rel (%p12) target = $region8
  $region5: #{resnet_block_forward.1} parent=0 // loop_body
    %s16 = ssub.s32 %s11, 1
    %s17 = ssub.s32 %s11, 2
    %s18 = sadd.s32 %s11, 1
    %s19 = ssub.s32 %s11, %s18
    %p20 = scmp.eq.s32.totalorder %s19, 0
    %s22 = sadd.s32 %s21, 1
    %s23 = scalar_select %p20, %s21, %s22
    %p26 = pneg %p20
    %p27 = scmp.eq.s32.totalorder %s11, 1
    %p28 = por %p26, %p27
    %p29 = scmp.ne.s32.totalorder %s21, %s24
    %p30 = scmp.eq.s32.totalorder %s11, 0
    %p31 = por %p29, %p30
    %p32 = scmp.ne.s32.totalorder %s21, %s24
    %p33 = scmp.eq.s32.totalorder %s16, 1
    %p34 = por %p32, %p33
    %p35 = scmp.ne.s32.totalorder %s24, %s25
    %p36 = scmp.eq.s32.totalorder %s16, 0
    %p37 = por %p35, %p36
    %p38 = scmp.ne.s32.totalorder %s24, %s25
    %p39 = scmp.eq.s32.totalorder %s17, 1
    %p40 = por %p38, %p39
    %p42 = scmp.ne.s32.totalorder %s25, %s41
    %p43 = scmp.eq.s32.totalorder %s17, 0
    %p44 = por %p42, %p43
    %s46 = sadd.s32 %s45, 1
    %p49 = scmp.eq.s32.totalorder %s11, 1
    %p50 = scmp.ne.s32.totalorder %s45, %s47
    %p51 = scmp.eq.s32.totalorder %s11, 0
    %p52 = por %p50, %p51
    %p53 = scmp.ne.s32.totalorder %s45, %s47
    %p54 = scmp.eq.s32.totalorder %s16, 1
    %p55 = por %p53, %p54
    %p56 = scmp.ne.s32.totalorder %s47, %s48
    %p57 = scmp.eq.s32.totalorder %s16, 0
    %p58 = por %p56, %p57
    %p59 = scmp.ne.s32.totalorder %s47, %s48
    %p60 = scmp.eq.s32.totalorder %s17, 1
    %p61 = por %p59, %p60
    %p63 = scmp.ne.s32.totalorder %s48, %s62
    %p64 = scmp.eq.s32.totalorder %s17, 0
    %p65 = por %p63, %p64
    %s67 = sadd.s32 %s66, 1
    %p70 = scmp.eq.s32.totalorder %s11, 1
    %p71 = scmp.ne.s32.totalorder %s66, %s68
    %p72 = scmp.eq.s32.totalorder %s11, 0
    %p73 = por %p71, %p72
    %p74 = scmp.ne.s32.totalorder %s66, %s68
    %p75 = scmp.eq.s32.totalorder %s16, 1
    %p76 = por %p74, %p75
    %p77 = scmp.ne.s32.totalorder %s68, %s69
    %p78 = scmp.eq.s32.totalorder %s16, 0
    %p79 = por %p77, %p78
    %p80 = scmp.ne.s32.totalorder %s68, %s69
    %p81 = scmp.eq.s32.totalorder %s17, 1
    %p82 = por %p80, %p81
    %p84 = scmp.ne.s32.totalorder %s69, %s83
    %p85 = scmp.eq.s32.totalorder %s17, 0
    %p86 = por %p84, %p85
    %s88 = sadd.s32 %s87, 1
    %p91 = scmp.eq.s32.totalorder %s11, 1
    %p92 = scmp.ne.s32.totalorder %s87, %s89
    %p93 = scmp.eq.s32.totalorder %s11, 0
    %p94 = por %p92, %p93
    %p95 = scmp.ne.s32.totalorder %s87, %s89
    %p96 = scmp.eq.s32.totalorder %s16, 1
    %p97 = por %p95, %p96
    %p98 = scmp.ne.s32.totalorder %s89, %s90
    %p99 = scmp.eq.s32.totalorder %s16, 0
    %p100 = por %p98, %p99
    %p101 = scmp.ne.s32.totalorder %s89, %s90
    %p102 = scmp.eq.s32.totalorder %s17, 1
    %p103 = por %p101, %p102
    %p105 = scmp.ne.s32.totalorder %s90, %s104
    %p106 = scmp.eq.s32.totalorder %s17, 0
    %p107 = por %p105, %p106
    %s109 = sadd.s32 %s108, 1
    %p112 = scmp.eq.s32.totalorder %s11, 1
    %p113 = scmp.ne.s32.totalorder %s108, %s110
    %p114 = scmp.eq.s32.totalorder %s11, 0
    %p115 = por %p113, %p114
    %p116 = scmp.ne.s32.totalorder %s108, %s110
    %p117 = scmp.eq.s32.totalorder %s16, 1
    %p118 = por %p116, %p117
    %p119 = scmp.ne.s32.totalorder %s110, %s111
    %p120 = scmp.eq.s32.totalorder %s16, 0
    %p121 = por %p119, %p120
    %p122 = scmp.ne.s32.totalorder %s110, %s111
    %p123 = scmp.eq.s32.totalorder %s17, 1
    %p124 = por %p122, %p123
    %p126 = scmp.ne.s32.totalorder %s111, %s125
    %p127 = scmp.eq.s32.totalorder %s17, 0
    %p128 = por %p126, %p127
    %s129 = ssub.s32 %s11, %s18
    %p130 = scmp.eq.s32.totalorder %s129, 0
    %s132 = sadd.s32 %s131, 1
    %s133 = scalar_select %p130, %s131, %s132
    %p136 = pneg %p130
    %p137 = scmp.eq.s32.totalorder %s11, 1
    %p138 = por %p136, %p137
    %p139 = scmp.ne.s32.totalorder %s131, %s134
    %p140 = scmp.eq.s32.totalorder %s11, 0
    %p141 = por %p139, %p140
    %p142 = scmp.ne.s32.totalorder %s131, %s134
    %p143 = scmp.eq.s32.totalorder %s16, 1
    %p144 = por %p142, %p143
    %p145 = scmp.ne.s32.totalorder %s134, %s135
    %p146 = scmp.eq.s32.totalorder %s16, 0
    %p147 = por %p145, %p146
    %p148 = scmp.ne.s32.totalorder %s134, %s135
    %p149 = scmp.eq.s32.totalorder %s17, 1
    %p150 = por %p148, %p149
    %p152 = scmp.ne.s32.totalorder %s135, %s151
    %p153 = scmp.eq.s32.totalorder %s17, 0
    %p154 = por %p152, %p153
    %p155 = scmp.le.s32.totalorder 1, %s11
    %p156 = scmp.lt.s32.totalorder %s11, 3
    %p157 = pnand %p155, %p156
    %p158 = pneg %p157
    // Predicated region
    $region9: #{resnet_block_forward.1} parent=5 // pred_check
      _
    $region10: #{resnet_block_forward.1} parent=5 // pred_check_branch
      %160 = sbr.rel (%p157) target = $region12
    $region11: #{resnet_block_forward.1} parent=5 // pred_region
      %s161 = ssub.s32 %s11, 1
      // Predicated region
      $region13: #{resnet_block_forward.1} parent=11 // pred_check
        %p162 = pneg %p58
      $region14: #{resnet_block_forward.1} parent=11 // pred_check_branch
        %164 = sbr.rel (%p162) target = $region16
      $region15: #{resnet_block_forward.1} parent=11 // pred_region
        _
      $region16: #{resnet_block_forward.1} parent=11 // pred_fallthru
        _
      // Predicated region
      $region17: #{resnet_block_forward.1} parent=11 // pred_check
        %p165 = pneg %p79
      $region18: #{resnet_block_forward.1} parent=11 // pred_check_branch
        %167 = sbr.rel (%p165) target = $region20
      $region19: #{resnet_block_forward.1} parent=11 // pred_region
        _
      $region20: #{resnet_block_forward.1} parent=11 // pred_fallthru
        _
      // Predicated region
      $region21: #{resnet_block_forward.1} parent=11 // pred_check
        %p168 = pneg %p100
      $region22: #{resnet_block_forward.1} parent=11 // pred_check_branch
        %170 = sbr.rel (%p168) target = $region24
      $region23: #{resnet_block_forward.1} parent=11 // pred_region
        _
      $region24: #{resnet_block_forward.1} parent=11 // pred_fallthru
        _
      // Predicated region
      $region25: #{resnet_block_forward.1} parent=11 // pred_check
        %p171 = pneg %p121
      $region26: #{resnet_block_forward.1} parent=11 // pred_check_branch
        %173 = sbr.rel (%p171) target = $region28
      $region27: #{resnet_block_forward.1} parent=11 // pred_region
        _
      $region28: #{resnet_block_forward.1} parent=11 // pred_fallthru
        _
    $region12: #{resnet_block_forward.1} parent=5 // pred_fallthru
      _
    %p174 = scmp.lt.s32.totalorder %s11, 2
    // Predicated region
    $region29: #{resnet_block_forward.1} parent=5 // pred_check
      %p175 = pneg %p174
    $region30: #{resnet_block_forward.1} parent=5 // pred_check_branch
      %177 = sbr.rel (%p175) target = $region32
    $region31: #{resnet_block_forward.1} parent=5 // pred_region
      // Predicated region
      $region33: #{resnet_block_forward.1} parent=31 // pred_check
        %p178 = pneg %p31
      $region34: #{resnet_block_forward.1} parent=31 // pred_check_branch
        %180 = sbr.rel (%p178) target = $region36
      $region35: #{resnet_block_forward.1} parent=31 // pred_region
        %p181 = scmp.lt.s32.totalorder %s11, 1
        %s182 = scalar_select %p181, %s11, 1
        %s183 = smul.addr %s182, 2
        %s184 = smul.addr %s183, 4
        %s185 = scalar_lea.vmem %s0, %s184
      $region36: #{resnet_block_forward.1} parent=31 // pred_fallthru
        _
    $region32: #{resnet_block_forward.1} parent=5 // pred_fallthru
      _
    %p186 = scmp.le.s32.totalorder 1, %s11
    %p187 = scmp.lt.s32.totalorder %s11, 3
    %p188 = pnand %p186, %p187
    %p189 = pneg %p188
    // Predicated region
    $region37: #{resnet_block_forward.1} parent=5 // pred_check
      _
    $region38: #{resnet_block_forward.1} parent=5 // pred_check_branch
      %191 = sbr.rel (%p188) target = $region40
    $region39: #{resnet_block_forward.1} parent=5 // pred_region
      %s192 = ssub.s32 %s11, 1
      %p193 = scmp.lt.s32.totalorder %s16, 1
      %s194 = scalar_select %p193, %s16, 1
      %s195 = smul.addr %s194, 2
      %s196 = smul.addr %s195, 4
      %s197 = scalar_lea.vmem %s0, %s196
      %p198 = pneg %p37
      %p199 = pneg %p34
      %p200 = pneg %p58
      %p201 = pneg %p55
      %p202 = pneg %p79
      %p203 = pneg %p76
      %p204 = pneg %p100
      %p205 = pneg %p97
      %p206 = pneg %p121
      %p207 = pneg %p118
      %p208 = pneg %p147
      %p209 = pneg %p144
      %p210 = scmp.lt.s32.totalorder %s16, 1
      %s211 = scalar_select %p210, %s16, 1
      %s212 = smul.addr %s211, 2
      %s213 = smul.addr %s212, 4
      %s214 = scalar_lea.vmem %s5, %s213
      %p215 = scmp.lt.s32.totalorder %s16, 1
      %s216 = scalar_select %p215, %s16, 1
      %s217 = smul.addr %s216, 2
      %s218 = smul.addr %s217, 4
      %s219 = scalar_lea.vmem %s0, %s218
      %p220 = scmp.lt.s32.totalorder %s16, 1
      %s221 = scalar_select %p220, %s16, 1
      %s222 = smul.addr %s221, 2
      %s223 = smul.addr %s222, 4
      %s224 = scalar_lea.vmem %s5, %s223
      %v226 = vld [vmem:[%s219] sm:$0xf]
      %v227 = vld [vmem:[%s219 + $0x4] sm:$0xf]
      %v228 = vld [vmem:[%s1] sm:$0xff]
      %v229 = vld [vmem:[%s1 + $0x8] sm:$0xff]
      %v230 = vld [vmem:[%s1 + $0x10] sm:$0xff]
      %v231 = vld [vmem:[%s1 + $0x18] sm:$0xff]
      %v232 = vld [vmem:[%s1 + $0x20] sm:$0xff]
      %v233 = vld [vmem:[%s1 + $0x28] sm:$0xff]
      %v234 = vld [vmem:[%s1 + $0x30] sm:$0xff]
      %v235 = vld [vmem:[%s1 + $0x38] sm:$0xff]
      %v236 = vld [vmem:[%s1 + $0x40] sm:$0xff]
      %v237 = vld [vmem:[%s1 + $0x48] sm:$0xff]
      %v238 = vld [vmem:[%s1 + $0x50] sm:$0xff]
      %v239 = vld [vmem:[%s1 + $0x58] sm:$0xff]
      %v240 = vld [vmem:[%s1 + $0x60] sm:$0xff]
      %v241 = vld [vmem:[%s1 + $0x68] sm:$0xff]
      %v242 = vld [vmem:[%s1 + $0x70] sm:$0xff]
      %v243 = vld [vmem:[%s1 + $0x78] sm:$0xff]
      %v244 = vld [vmem:[%s1 + $0x80] sm:$0xff]
      %v245 = vld [vmem:[%s1 + $0x88] sm:$0xff]
      %v246 = vld [vmem:[%s1 + $0x90] sm:$0xff]
      %v247 = vld [vmem:[%s1 + $0x98] sm:$0xff]
      %v248 = vld [vmem:[%s1 + $0xa0] sm:$0xff]
      %v249 = vld [vmem:[%s1 + $0xa8] sm:$0xff]
      %v250 = vld [vmem:[%s1 + $0xb0] sm:$0xff]
      %v251 = vld [vmem:[%s1 + $0xb8] sm:$0xff]
      %v252 = vld [vmem:[%s1 + $0xc0] sm:$0xff]
      %v253 = vld [vmem:[%s1 + $0xc8] sm:$0xff]
      %v254 = vld [vmem:[%s1 + $0xd0] sm:$0xff]
      %v255 = vld [vmem:[%s1 + $0xd8] sm:$0xff]
      %v256 = vld [vmem:[%s1 + $0xe0] sm:$0xff]
      %v257 = vld [vmem:[%s1 + $0xe8] sm:$0xff]
      %v258 = vld [vmem:[%s1 + $0xf0] sm:$0xff]
      %v259 = vld [vmem:[%s1 + $0xf8] sm:$0xff]
      %v262 = vunpack.c.l.b16 %v226
      %v263 = vunpack.c.l.b16 %v227
      %v264 = vpack.c.b16 %v263, %v262
      %v298 = vunpack.c.l.b16 %v228
      %v299 = vunpack.c.h.b16 %v228
      %v300 = vunpack.c.l.b16 %v229
      %v301 = vunpack.c.h.b16 %v229
      %v302 = vunpack.c.l.b16 %v230
      %v303 = vunpack.c.h.b16 %v230
      %v304 = vunpack.c.l.b16 %v231
      %v305 = vunpack.c.h.b16 %v231
      %v306 = vunpack.c.l.b16 %v232
      %v307 = vunpack.c.h.b16 %v232
      %v308 = vunpack.c.l.b16 %v233
      %v309 = vunpack.c.h.b16 %v233
      %v310 = vunpack.c.l.b16 %v234
      %v311 = vunpack.c.h.b16 %v234
      %v312 = vunpack.c.l.b16 %v235
      %v313 = vunpack.c.h.b16 %v235
      %v314 = vunpack.c.l.b16 %v236
      %v315 = vunpack.c.h.b16 %v236
      %v316 = vunpack.c.l.b16 %v237
      %v317 = vunpack.c.h.b16 %v237
      %v318 = vunpack.c.l.b16 %v238
      %v319 = vunpack.c.h.b16 %v238
      %v320 = vunpack.c.l.b16 %v239
      %v321 = vunpack.c.h.b16 %v239
      %v322 = vunpack.c.l.b16 %v240
      %v323 = vunpack.c.h.b16 %v240
      %v324 = vunpack.c.l.b16 %v241
      %v325 = vunpack.c.h.b16 %v241
      %v326 = vunpack.c.l.b16 %v242
      %v327 = vunpack.c.h.b16 %v242
      %v328 = vunpack.c.l.b16 %v243
      %v329 = vunpack.c.h.b16 %v243
      %v330 = vunpack.c.l.b16 %v244
      %v331 = vunpack.c.h.b16 %v244
      %v332 = vunpack.c.l.b16 %v245
      %v333 = vunpack.c.h.b16 %v245
      %v334 = vunpack.c.l.b16 %v246
      %v335 = vunpack.c.h.b16 %v246
      %v336 = vunpack.c.l.b16 %v247
      %v337 = vunpack.c.h.b16 %v247
      %v338 = vunpack.c.l.b16 %v248
      %v339 = vunpack.c.h.b16 %v248
      %v340 = vunpack.c.l.b16 %v249
      %v341 = vunpack.c.h.b16 %v249
      %v342 = vunpack.c.l.b16 %v250
      %v343 = vunpack.c.h.b16 %v250
      %v344 = vunpack.c.l.b16 %v251
      %v345 = vunpack.c.h.b16 %v251
      %v346 = vunpack.c.l.b16 %v252
      %v347 = vunpack.c.h.b16 %v252
      %v348 = vunpack.c.l.b16 %v253
      %v349 = vunpack.c.h.b16 %v253
      %v350 = vunpack.c.l.b16 %v254
      %v351 = vunpack.c.h.b16 %v254
      %v352 = vunpack.c.l.b16 %v255
      %v353 = vunpack.c.h.b16 %v255
      %v354 = vunpack.c.l.b16 %v256
      %v355 = vunpack.c.h.b16 %v256
      %v356 = vunpack.c.l.b16 %v257
      %v357 = vunpack.c.h.b16 %v257
      %v358 = vunpack.c.l.b16 %v258
      %v359 = vunpack.c.h.b16 %v258
      %v360 = vunpack.c.l.b16 %v259
      %v361 = vunpack.c.h.b16 %v259
      %v362 = vpack.c.b16 %v302, %v298
      %v363 = vpack.c.b16 %v303, %v299
      %v364 = vpack.c.b16 %v304, %v300
      %v365 = vpack.c.b16 %v305, %v301
      %v366 = vpack.c.b16 %v310, %v306
      %v367 = vpack.c.b16 %v311, %v307
      %v368 = vpack.c.b16 %v312, %v308
      %v369 = vpack.c.b16 %v313, %v309
      %v370 = vpack.c.b16 %v318, %v314
      %v371 = vpack.c.b16 %v319, %v315
      %v372 = vpack.c.b16 %v320, %v316
      %v373 = vpack.c.b16 %v321, %v317
      %v374 = vpack.c.b16 %v326, %v322
      %v375 = vpack.c.b16 %v327, %v323
      %v376 = vpack.c.b16 %v328, %v324
      %v377 = vpack.c.b16 %v329, %v325
      %v378 = vpack.c.b16 %v334, %v330
      %v379 = vpack.c.b16 %v335, %v331
      %v380 = vpack.c.b16 %v336, %v332
      %v381 = vpack.c.b16 %v337, %v333
      %v382 = vpack.c.b16 %v342, %v338
      %v383 = vpack.c.b16 %v343, %v339
      %v384 = vpack.c.b16 %v344, %v340
      %v385 = vpack.c.b16 %v345, %v341
      %v386 = vpack.c.b16 %v350, %v346
      %v387 = vpack.c.b16 %v351, %v347
      %v388 = vpack.c.b16 %v352, %v348
      %v389 = vpack.c.b16 %v353, %v349
      %v390 = vpack.c.b16 %v358, %v354
      %v391 = vpack.c.b16 %v359, %v355
      %v392 = vpack.c.b16 %v360, %v356
      %v393 = vpack.c.b16 %v361, %v357
      %426 = vmatprep.subr.bf16.mxu0 %v391
      %427 = vmatpush1.bf16.msra.mxu0 %v390
      %428 = vmatprep.subr.bf16.mxu0 %v387
      %429 = vmatpush1.bf16.msra.mxu0 %v386
      %430 = vmatprep.subr.bf16.mxu0 %v383
      %431 = vmatpush1.bf16.msra.mxu0 %v382
      %432 = vmatprep.subr.bf16.mxu0 %v379
      %433 = vmatpush1.bf16.msra.mxu0 %v378
      %434 = vmatprep.subr.bf16.mxu0 %v375
      %435 = vmatpush1.bf16.msra.mxu0 %v374
      %436 = vmatprep.subr.bf16.mxu0 %v371
      %437 = vmatpush1.bf16.msra.mxu0 %v370
      %438 = vmatprep.subr.bf16.mxu0 %v367
      %439 = vmatpush1.bf16.msra.mxu0 %v366
      %440 = vmatprep.subr.bf16.mxu0 %v363
      %441 = vmatpush1.bf16.msra.mxu0 %v362
      %442 = vmatprep.subr.bf16.mxu0 0
      %443 = vmatpush2.bf16.msra.mxu0 0
      %444 = vmatprep.subr.bf16.mxu0 0
      %445 = vmatpush2.bf16.msra.mxu0 0
      %446 = vmatprep.subr.bf16.mxu0 0
      %447 = vmatpush2.bf16.msra.mxu0 0
      %448 = vmatprep.subr.bf16.mxu0 0
      %449 = vmatpush2.bf16.msra.mxu0 0
      %450 = vmatprep.subr.bf16.mxu0 0
      %451 = vmatpush2.bf16.msra.mxu0 0
      %452 = vmatprep.subr.bf16.mxu0 0
      %453 = vmatpush2.bf16.msra.mxu0 0
      %454 = vmatprep.subr.bf16.mxu0 0
      %455 = vmatpush2.bf16.msra.mxu0 0
      %456 = vmatprep.subr.bf16.mxu0 0
      %457 = vmatpush2.bf16.msra.mxu0 0
      %458 = vmatprep.mubr.bf16.mxu0 0
      %459 = vmatmul.mubr.bf16.gmra.mxu0 %v264
      %v460 = vpop.f32.mrf.mxu0
      %v461 = vadd.f32 0.0, %v460
      %v462 = vpop.f32.mrf.mxu0
      %v463 = vadd.f32 0.0, %v462
      %v464 = vpop.f32.mrf.mxu0
      %v465 = vadd.f32 0.0, %v464
      %v466 = vpop.f32.mrf.mxu0
      %v467 = vadd.f32 0.0, %v466
      %468 = vdwg.mxu0
      %469 = vmatprep.subr.bf16.mxu0 %v393
      %470 = vmatpush1.bf16.msra.mxu0 %v392
      %471 = vmatprep.subr.bf16.mxu0 %v389
      %472 = vmatpush1.bf16.msra.mxu0 %v388
      %473 = vmatprep.subr.bf16.mxu0 %v385
      %474 = vmatpush1.bf16.msra.mxu0 %v384
      %475 = vmatprep.subr.bf16.mxu0 %v381
      %476 = vmatpush1.bf16.msra.mxu0 %v380
      %477 = vmatprep.subr.bf16.mxu0 %v377
      %478 = vmatpush1.bf16.msra.mxu0 %v376
      %479 = vmatprep.subr.bf16.mxu0 %v373
      %480 = vmatpush1.bf16.msra.mxu0 %v372
      %481 = vmatprep.subr.bf16.mxu0 %v369
      %482 = vmatpush1.bf16.msra.mxu0 %v368
      %483 = vmatprep.subr.bf16.mxu0 %v365
      %484 = vmatpush1.bf16.msra.mxu0 %v364
      %485 = vmatprep.subr.bf16.mxu0 0
      %486 = vmatpush2.bf16.msra.mxu0 0
      %487 = vmatprep.subr.bf16.mxu0 0
      %488 = vmatpush2.bf16.msra.mxu0 0
      %489 = vmatprep.subr.bf16.mxu0 0
      %490 = vmatpush2.bf16.msra.mxu0 0
      %491 = vmatprep.subr.bf16.mxu0 0
      %492 = vmatpush2.bf16.msra.mxu0 0
      %493 = vmatprep.subr.bf16.mxu0 0
      %494 = vmatpush2.bf16.msra.mxu0 0
      %495 = vmatprep.subr.bf16.mxu0 0
      %496 = vmatpush2.bf16.msra.mxu0 0
      %497 = vmatprep.subr.bf16.mxu0 0
      %498 = vmatpush2.bf16.msra.mxu0 0
      %499 = vmatprep.subr.bf16.mxu0 0
      %500 = vmatpush2.bf16.msra.mxu0 0
      %501 = vmatprep.mubr.bf16.mxu0 0
      %502 = vmatmul.mubr.bf16.gmra.mxu0 %v264
      %v503 = vpop.f32.mrf.mxu0
      %v504 = vadd.f32 0.0, %v503
      %v505 = vpop.f32.mrf.mxu0
      %v506 = vadd.f32 0.0, %v505
      %v507 = vpop.f32.mrf.mxu0
      %v508 = vadd.f32 0.0, %v507
      %v509 = vpop.f32.mrf.mxu0
      %v510 = vadd.f32 0.0, %v509
      %511 = vdwg.mxu0
      %v512 = vlaneseq
      %v513 = vshrl.u32 %v512, 7
      %v514 = vadd.s32 %v513, 8
      %vm515 = vcmp.eq.s32.totalorder %v513, 0
      %vm516 = vcmp.eq.s32.totalorder %v514, 0
      %v517 = vrot.slane %v461, 7
      %v518 = vrot.slane %v465, 7
      %vm519 = vcmp.lt.s32.totalorder %v513, 1
      %v520 = vsel %vm519, %v517, %v518
      %v521 = vsel %vm519, %v518, %v517
      %v522 = vsel %vm515, 0.0, %v521
      %v523 = vsel %vm516, 0.0, %v520
      %vm524 = vcmp.eq.s32.totalorder %v513, 15
      %vm525 = vcmp.eq.s32.totalorder %v514, 15
      %v526 = vrot.slane %v504, 1
      %v527 = vrot.slane %v508, 1
      %vm528 = vcmp.lt.s32.totalorder %v513, 7
      %v529 = vsel %vm528, %v526, %v527
      %v530 = vsel %vm528, %v527, %v526
      %v531 = vsel %vm524, 0.0, %v529
      %v532 = vsel %vm525, 0.0, %v530
      %v533 = vadd.f32 %v522, %v463
      %v534 = vadd.f32 %v523, %v467
      %v535 = vadd.f32 %v533, %v531
      %v536 = vadd.f32 %v534, %v532
      %v537 = vld [vmem:[%s2] sm:$0x1]
      %v539 = vlaneseq
      %v540 = vshrl.u32 %v539, 7
      %v541 = vsub.s32 0, %v540
      %v542 = vrot.slane %v537, %v541
      %v544 = vadd.f32 %v535, %v542
      %v545 = vadd.f32 %v536, %v542
      %v546 = vmax.f32 %v544, 0.0
      %v547 = vmax.f32 %v545, 0.0
      %v548 = vpack.c.bf16 %v547, %v546
      %v549 = vld [vmem:[%s3] sm:$0xff]
      %v550 = vld [vmem:[%s3 + $0x8] sm:$0xf]
      %v551 = vld [vmem:[%s3 + $0xc] sm:$0xff]
      %v552 = vld [vmem:[%s3 + $0x14] sm:$0xf]
      %v553 = vld [vmem:[%s3 + $0x18] sm:$0xff]
      %v554 = vld [vmem:[%s3 + $0x20] sm:$0xf]
      %v555 = vld [vmem:[%s3 + $0x24] sm:$0xff]
      %v556 = vld [vmem:[%s3 + $0x2c] sm:$0xf]
      %v557 = vld [vmem:[%s3 + $0x30] sm:$0xff]
      %v558 = vld [vmem:[%s3 + $0x38] sm:$0xf]
      %v559 = vld [vmem:[%s3 + $0x3c] sm:$0xff]
      %v560 = vld [vmem:[%s3 + $0x44] sm:$0xf]
      %v561 = vld [vmem:[%s3 + $0x48] sm:$0xff]
      %v562 = vld [vmem:[%s3 + $0x50] sm:$0xf]
      %v563 = vld [vmem:[%s3 + $0x54] sm:$0xff]
      %v564 = vld [vmem:[%s3 + $0x5c] sm:$0xf]
      %v565 = vld [vmem:[%s3 + $0x60] sm:$0xff]
      %v566 = vld [vmem:[%s3 + $0x68] sm:$0xf]
      %v567 = vld [vmem:[%s3 + $0x6c] sm:$0xff]
      %v568 = vld [vmem:[%s3 + $0x74] sm:$0xf]
      %v569 = vld [vmem:[%s3 + $0x78] sm:$0xff]
      %v570 = vld [vmem:[%s3 + $0x80] sm:$0xf]
      %v571 = vld [vmem:[%s3 + $0x84] sm:$0xff]
      %v572 = vld [vmem:[%s3 + $0x8c] sm:$0xf]
      %v573 = vld [vmem:[%s3 + $0x90] sm:$0xff]
      %v574 = vld [vmem:[%s3 + $0x98] sm:$0xf]
      %v575 = vld [vmem:[%s3 + $0x9c] sm:$0xff]
      %v576 = vld [vmem:[%s3 + $0xa4] sm:$0xf]
      %v577 = vld [vmem:[%s3 + $0xa8] sm:$0xff]
      %v578 = vld [vmem:[%s3 + $0xb0] sm:$0xf]
      %v579 = vld [vmem:[%s3 + $0xb4] sm:$0xff]
      %v580 = vld [vmem:[%s3 + $0xbc] sm:$0xf]
      %v613 = vunpack.c.l.b16 %v549
      %v614 = vunpack.c.h.b16 %v549
      %v615 = vunpack.c.l.b16 %v550
      %v616 = vunpack.c.l.b16 %v551
      %v617 = vunpack.c.h.b16 %v551
      %v618 = vunpack.c.l.b16 %v552
      %v619 = vunpack.c.l.b16 %v553
      %v620 = vunpack.c.h.b16 %v553
      %v621 = vunpack.c.l.b16 %v554
      %v622 = vunpack.c.l.b16 %v555
      %v623 = vunpack.c.h.b16 %v555
      %v624 = vunpack.c.l.b16 %v556
      %v625 = vunpack.c.l.b16 %v557
      %v626 = vunpack.c.h.b16 %v557
      %v627 = vunpack.c.l.b16 %v558
      %v628 = vunpack.c.l.b16 %v559
      %v629 = vunpack.c.h.b16 %v559
      %v630 = vunpack.c.l.b16 %v560
      %v631 = vunpack.c.l.b16 %v561
      %v632 = vunpack.c.h.b16 %v561
      %v633 = vunpack.c.l.b16 %v562
      %v634 = vunpack.c.l.b16 %v563
      %v635 = vunpack.c.h.b16 %v563
      %v636 = vunpack.c.l.b16 %v564
      %v637 = vunpack.c.l.b16 %v565
      %v638 = vunpack.c.h.b16 %v565
      %v639 = vunpack.c.l.b16 %v566
      %v640 = vunpack.c.l.b16 %v567
      %v641 = vunpack.c.h.b16 %v567
      %v642 = vunpack.c.l.b16 %v568
      %v643 = vunpack.c.l.b16 %v569
      %v644 = vunpack.c.h.b16 %v569
      %v645 = vunpack.c.l.b16 %v570
      %v646 = vunpack.c.l.b16 %v571
      %v647 = vunpack.c.h.b16 %v571
      %v648 = vunpack.c.l.b16 %v572
      %v649 = vunpack.c.l.b16 %v573
      %v650 = vunpack.c.h.b16 %v573
      %v651 = vunpack.c.l.b16 %v574
      %v652 = vunpack.c.l.b16 %v575
      %v653 = vunpack.c.h.b16 %v575
      %v654 = vunpack.c.l.b16 %v576
      %v655 = vunpack.c.l.b16 %v577
      %v656 = vunpack.c.h.b16 %v577
      %v657 = vunpack.c.l.b16 %v578
      %v658 = vunpack.c.l.b16 %v579
      %v659 = vunpack.c.h.b16 %v579
      %v660 = vunpack.c.l.b16 %v580
      %v661 = vpack.c.b16 %v616, %v613
      %v662 = vpack.c.b16 %v617, %v614
      %v663 = vpack.c.b16 %v618, %v615
      %v664 = vpack.c.b16 %v622, %v619
      %v665 = vpack.c.b16 %v623, %v620
      %v666 = vpack.c.b16 %v624, %v621
      %v667 = vpack.c.b16 %v628, %v625
      %v668 = vpack.c.b16 %v629, %v626
      %v669 = vpack.c.b16 %v630, %v627
      %v670 = vpack.c.b16 %v634, %v631
      %v671 = vpack.c.b16 %v635, %v632
      %v672 = vpack.c.b16 %v636, %v633
      %v673 = vpack.c.b16 %v640, %v637
      %v674 = vpack.c.b16 %v641, %v638
      %v675 = vpack.c.b16 %v642, %v639
      %v676 = vpack.c.b16 %v646, %v643
      %v677 = vpack.c.b16 %v647, %v644
      %v678 = vpack.c.b16 %v648, %v645
      %v679 = vpack.c.b16 %v652, %v649
      %v680 = vpack.c.b16 %v653, %v650
      %v681 = vpack.c.b16 %v654, %v651
      %v682 = vpack.c.b16 %v658, %v655
      %v683 = vpack.c.b16 %v659, %v656
      %v684 = vpack.c.b16 %v660, %v657
      %709 = vmatprep.subr.bf16.mxu0 %v683
      %710 = vmatpush1.bf16.msra.mxu0 %v682
      %711 = vmatprep.subr.bf16.mxu0 %v680
      %712 = vmatpush1.bf16.msra.mxu0 %v679
      %713 = vmatprep.subr.bf16.mxu0 %v677
      %714 = vmatpush1.bf16.msra.mxu0 %v676
      %715 = vmatprep.subr.bf16.mxu0 %v674
      %716 = vmatpush1.bf16.msra.mxu0 %v673
      %717 = vmatprep.subr.bf16.mxu0 %v671
      %718 = vmatpush1.bf16.msra.mxu0 %v670
      %719 = vmatprep.subr.bf16.mxu0 %v668
      %720 = vmatpush1.bf16.msra.mxu0 %v667
      %721 = vmatprep.subr.bf16.mxu0 %v665
      %722 = vmatpush1.bf16.msra.mxu0 %v664
      %723 = vmatprep.subr.bf16.mxu0 %v662
      %724 = vmatpush1.bf16.msra.mxu0 %v661
      %725 = vmatprep.subr.bf16.mxu0 0
      %726 = vmatpush2.bf16.msra.mxu0 0
      %727 = vmatprep.subr.bf16.mxu0 0
      %728 = vmatpush2.bf16.msra.mxu0 0
      %729 = vmatprep.subr.bf16.mxu0 0
      %730 = vmatpush2.bf16.msra.mxu0 0
      %731 = vmatprep.subr.bf16.mxu0 0
      %732 = vmatpush2.bf16.msra.mxu0 0
      %733 = vmatprep.subr.bf16.mxu0 0
      %734 = vmatpush2.bf16.msra.mxu0 0
      %735 = vmatprep.subr.bf16.mxu0 0
      %736 = vmatpush2.bf16.msra.mxu0 0
      %737 = vmatprep.subr.bf16.mxu0 0
      %738 = vmatpush2.bf16.msra.mxu0 0
      %739 = vmatprep.subr.bf16.mxu0 0
      %740 = vmatpush2.bf16.msra.mxu0 0
      %741 = vmatprep.mubr.bf16.mxu0 0
      %742 = vmatmul.mubr.bf16.gmra.mxu0 %v548
      %v743 = vpop.f32.mrf.mxu0
      %v744 = vadd.f32 0.0, %v743
      %v745 = vpop.f32.mrf.mxu0
      %v746 = vadd.f32 0.0, %v745
      %v747 = vpop.f32.mrf.mxu0
      %v748 = vadd.f32 0.0, %v747
      %v749 = vpop.f32.mrf.mxu0
      %v750 = vadd.f32 0.0, %v749
      %751 = vdwg.mxu0
      %752 = vmatprep.subr.bf16.mxu0 0
      %753 = vmatpush1.bf16.msra.mxu0 %v684
      %754 = vmatprep.subr.bf16.mxu0 0
      %755 = vmatpush1.bf16.msra.mxu0 %v681
      %756 = vmatprep.subr.bf16.mxu0 0
      %757 = vmatpush1.bf16.msra.mxu0 %v678
      %758 = vmatprep.subr.bf16.mxu0 0
      %759 = vmatpush1.bf16.msra.mxu0 %v675
      %760 = vmatprep.subr.bf16.mxu0 0
      %761 = vmatpush1.bf16.msra.mxu0 %v672
      %762 = vmatprep.subr.bf16.mxu0 0
      %763 = vmatpush1.bf16.msra.mxu0 %v669
      %764 = vmatprep.subr.bf16.mxu0 0
      %765 = vmatpush1.bf16.msra.mxu0 %v666
      %766 = vmatprep.subr.bf16.mxu0 0
      %767 = vmatpush1.bf16.msra.mxu0 %v663
      %768 = vmatprep.subr.bf16.mxu0 0
      %769 = vmatpush2.bf16.msra.mxu0 0
      %770 = vmatprep.subr.bf16.mxu0 0
      %771 = vmatpush2.bf16.msra.mxu0 0
      %772 = vmatprep.subr.bf16.mxu0 0
      %773 = vmatpush2.bf16.msra.mxu0 0
      %774 = vmatprep.subr.bf16.mxu0 0
      %775 = vmatpush2.bf16.msra.mxu0 0
      %776 = vmatprep.subr.bf16.mxu0 0
      %777 = vmatpush2.bf16.msra.mxu0 0
      %778 = vmatprep.subr.bf16.mxu0 0
      %779 = vmatpush2.bf16.msra.mxu0 0
      %780 = vmatprep.subr.bf16.mxu0 0
      %781 = vmatpush2.bf16.msra.mxu0 0
      %782 = vmatprep.subr.bf16.mxu0 0
      %783 = vmatpush2.bf16.msra.mxu0 0
      %784 = vmatprep.mubr.bf16.mxu0 0
      %785 = vmatmul.mubr.bf16.gmra.mxu0 %v548
      %v786 = vpop.f32.mrf.mxu0
      %v787 = vadd.f32 0.0, %v786
      %v788 = vpop.f32.mrf.mxu0
      %v789 = vpop.f32.mrf.mxu0
      %v790 = vadd.f32 0.0, %v789
      %v791 = vpop.f32.mrf.mxu0
      %792 = vdwg.mxu0
      %v793 = vrot.slane %v744, 7
      %v794 = vrot.slane %v748, 7
      %v795 = vsel %vm519, %v793, %v794
      %v796 = vsel %vm519, %v794, %v793
      %v797 = vsel %vm515, 0.0, %v796
      %v798 = vsel %vm516, 0.0, %v795
      %v799 = vrot.slane %v787, 1
      %v800 = vrot.slane %v790, 1
      %v801 = vsel %vm528, %v799, %v800
      %v802 = vsel %vm528, %v800, %v799
      %v803 = vsel %vm524, 0.0, %v801
      %v804 = vsel %vm525, 0.0, %v802
      %v805 = vadd.f32 %v797, %v746
      %v806 = vadd.f32 %v798, %v750
      %v807 = vadd.f32 %v805, %v803
      %v808 = vadd.f32 %v806, %v804
      %v809 = vadd.f32 %v807, %v506
      %v810 = vadd.f32 %v808, %v510
      %v811 = vld [vmem:[%s4] sm:$0x1]
      %v813 = vlaneseq
      %v814 = vshrl.u32 %v813, 7
      %v815 = vsub.s32 0, %v814
      %v816 = vrot.slane %v811, %v815
      %v818 = vadd.f32 %v809, %v816
      %v819 = vadd.f32 %v810, %v816
      %v820 = vmax.f32 %v818, 0.0
      %v821 = vmax.f32 %v819, 0.0
      %v822 = vpack.c.bf16 %v821, %v820
      %v824 = vunpack.c.l.b16 %v822
      %v825 = vunpack.c.h.b16 %v822
      %v826 = vpack.c.b16 %v824, %v824
      %v827 = vpack.c.b16 %v825, %v825
      %830 = vst [vmem:[%s224] sm:$0xf] %v826
      %831 = vst [vmem:[%s224 + $0x4] sm:$0xf] %v827
      %p832 = scmp.lt.s32.totalorder %s16, 1
      %s833 = scalar_select %p832, %s16, 1
      %s834 = smul.addr %s833, 2
      %s835 = smul.addr %s834, 4
      %s836 = scalar_lea.vmem %s5, %s835
      // Predicated region
      $region41: #{resnet_block_forward.1} parent=39 // pred_check
        %p837 = pneg %p144
      $region42: #{resnet_block_forward.1} parent=39 // pred_check_branch
        %839 = sbr.rel (%p837) target = $region44
      $region43: #{resnet_block_forward.1} parent=39 // pred_region
        _
      $region44: #{resnet_block_forward.1} parent=39 // pred_fallthru
        _
    $region40: #{resnet_block_forward.1} parent=5 // pred_fallthru
      _
    %p840 = scmp.le.s32.totalorder 2, %s11
    // Predicated region
    $region45: #{resnet_block_forward.1} parent=5 // pred_check
      %p841 = pneg %p840
    $region46: #{resnet_block_forward.1} parent=5 // pred_check_branch
      %843 = sbr.rel (%p841) target = $region48
    $region47: #{resnet_block_forward.1} parent=5 // pred_region
      %s844 = ssub.s32 %s11, 2
      // Predicated region
      $region49: #{resnet_block_forward.1} parent=47 // pred_check
        %p845 = pneg %p150
      $region50: #{resnet_block_forward.1} parent=47 // pred_check_branch
        %847 = sbr.rel (%p845) target = $region52
      $region51: #{resnet_block_forward.1} parent=47 // pred_region
        %p848 = scmp.lt.s32.totalorder %s17, 1
        %s849 = scalar_select %p848, %s17, 1
        %s850 = smul.addr %s849, 2
        %s851 = smul.addr %s850, 4
        %s852 = scalar_lea.vmem %s5, %s851
      $region52: #{resnet_block_forward.1} parent=47 // pred_fallthru
        _
    $region48: #{resnet_block_forward.1} parent=5 // pred_fallthru
      _
  $region6: #{resnet_block_forward.1} parent=0 // loop_footer
    %s15 = sadd.s32 1, %s11
  $region7: #{resnet_block_forward.1} parent=0 // loop_footer_branch
    %10 = sbr.rel target = $region3
  $region8: #{resnet_block_forward.1} parent=0 // loop_exit
    _

</llo_original>
